<compile_context>
chip_gen: v7x
topology: tpu7x:2x2x1
jax: 0.10.0
libtpu: 0.0.40
codegen_flags: <defaults>
</compile_context>

<pallas_src>
import jax
import jax.numpy as jnp
from jax import lax
from jax.experimental import pallas as pl
from jax.experimental.pallas import tpu as pltpu

BN_EPS = 1e-5
PAD_CIN = 8                      # xyz (3) padded to the f32 sublane minimum

CONV_DIMS = [(3, 64), (64, 64), (64, 64), (64, 128), (128, 1024)]


# ----------------------------------------------------------------------------
# Hardware-aware sizing helpers
# ----------------------------------------------------------------------------
def _physical_vmem_bytes():
    try:
        return int(pltpu.get_tpu_info().vmem_capacity_bytes)
    except Exception:
        return 64 << 20          # conservative fallback (v7x-sized)


def _supports_bf16_vpu():
    """bf16 VALU ops are native on v6e/v7x; v5e and older lack them."""
    try:
        kind = jax.devices()[0].device_kind.lower()
    except Exception:
        return False
    return not any(tag in kind for tag in ("v2", "v3", "v4", "v5"))


def _pick_tile(n_points, target):
    tile = min(n_points, target)
    while n_points % tile:
        tile -= 8                # number_points is divisible by 8
    return max(tile, 8)


def _pass_vmem_limit(tile_n, chain):
    """Tightened scoped-VMEM budget for one cascade pass: in-body activation
    chain (f32 + bf16 temps) + double-buffered x + resident bf16 weights +
    slack, instead of a blanket phys//2 window (review item)."""
    body = tile_n * (6 * sum(chain) + 4 * chain[-1])
    io = 4 * tile_n * PAD_CIN * 4                          # 2x double-buffered x
    wts = 4 * sum(ci * co for ci, co in zip(chain[:-1], chain[1:]))
    est = body + io + wts + (8 << 20)
    lo, hi = 24 << 20, _physical_vmem_bytes() - (8 << 20)
    return int(min(max(est, lo), hi))


# ----------------------------------------------------------------------------
# Kernel
# ----------------------------------------------------------------------------
def _make_cascade_kernel(n_layers, pool, bf16_minmax):
    """One (batch, point-tile) step of a cascading stats/recompute pass.

    Recomputes layers 1..n_layers-1 entirely in VMEM (finalized BN folded into
    scale/shift), computes layer n_layers raw (pre-BN, bias dropped) and
    accumulates its per-batch BN statistics.  With pool=True it also tracks
    the per-(batch, channel) running max/min, so the (B*N, 1024) activation
    never touches HBM.
    """
    n_prev = n_layers - 1

    def kernel(*refs):
        scales = refs[:n_prev]
        shifts = refs[n_prev:2 * n_prev]
        x_ref = refs[2 * n_prev]
        w_refs = refs[2 * n_prev + 1: 2 * n_prev + 1 + n_layers]
        outs = refs[2 * n_prev + 1 + n_layers:]
        sum_ref, ssq_ref = outs[0], outs[1]

        @pl.when(pl.program_id(1) == 0)          # first point-tile of this batch
        def _init():
            sum_ref[...] = jnp.zeros_like(sum_ref)
            ssq_ref[...] = jnp.zeros_like(ssq_ref)
            if pool:
                outs[2][...] = jnp.full_like(outs[2], -jnp.inf)
                outs[3][...] = jnp.full_like(outs[3], jnp.inf)

        # Recompute the prefix of the conv stack in VMEM (bf16 MXU, f32 acc).
        h = x_ref[...].astype(jnp.bfloat16)      # (tile_n, cin0)
        for j in range(n_prev):
            y = jnp.dot(h, w_refs[j][...], preferred_element_type=jnp.float32)
            h = jnp.maximum(y * scales[j][...] + shifts[j][...],
                            0.0).astype(jnp.bfloat16)

        # Raw (pre-BN) output of this pass's target layer.  Conv bias is
        # dropped: the following BN mean subtraction cancels it exactly.
        y = jnp.dot(h, w_refs[n_prev][...], preferred_element_type=jnp.float32)

        # Per-channel sum via the MXU: colsum(h) @ W == colsum(h @ W) exactly
        # (no bias), replacing a cout-wide VPU reduce with a cin-wide one.
        colsum_h = jnp.sum(h.astype(jnp.float32), axis=0, keepdims=True)
        sum_ref[...] += jnp.dot(colsum_h, w_refs[n_prev][...],
                                preferred_element_type=jnp.float32)
        ssq_ref[...] += jnp.sum(y * y, axis=0, keepdims=True)

        if pool:
            # Running max/min of the raw output; BN+ReLU are per-channel
            # monotone, so the pool is finished after the stats in the wrapper.
            yy = y.astype(jnp.bfloat16) if bf16_minmax else y
            tmax = jnp.max(yy, axis=0, keepdims=True).astype(jnp.float32)
            tmin = jnp.min(yy, axis=0, keepdims=True).astype(jnp.float32)
            outs[2][...] = jnp.maximum(outs[2][...], tmax)
            outs[3][...] = jnp.minimum(outs[3][...], tmin)

    return kernel


# ----------------------------------------------------------------------------
# pallas_call wrapper
# ----------------------------------------------------------------------------
def _cascade_call(scales, shifts, x, weights, *, pool, tile_n, bf16_minmax):
    B, N, cin0 = x.shape
    n_layers = len(weights)
    cout = weights[-1].shape[1]
    T = N // tile_n

    in_specs = (
        [pl.BlockSpec(s.shape, lambda b, t: (0, 0)) for s in scales]
        + [pl.BlockSpec(s.shape, lambda b, t: (0, 0)) for s in shifts]
        + [pl.BlockSpec((None, tile_n, cin0), lambda b, t: (b, t, 0))]
        + [pl.BlockSpec(w.shape, lambda b, t: (0, 0)) for w in weights]
    )

    n_out = 4 if pool else 2
    out_shape = tuple(jax.ShapeDtypeStruct((B, 1, cout), jnp.float32)
                      for _ in range(n_out))
    out_specs = [pl.BlockSpec((None, 1, cout), lambda b, t: (b, 0, 0))
                 for _ in range(n_out)]

    chain = [cin0] + [w.shape[1] for w in weights]
    flops = 2 * B * N * sum(ci * co for ci, co in zip(chain[:-1], chain[1:]))
    bytes_accessed = (x.size * x.dtype.itemsize
                      + sum(w.size * 2 for w in weights)
                      + sum(s.size * 4 for s in scales) * 2
                      + n_out * B * cout * 4)

    return pl.pallas_call(
        _make_cascade_kernel(n_layers, pool, bf16_minmax),
        out_shape=out_shape,
        grid_spec=pltpu.PrefetchScalarGridSpec(
            num_scalar_prefetch=0,
            grid=(B, T),
            in_specs=in_specs,
            out_specs=out_specs),
        compiler_params=pltpu.CompilerParams(
            # batch axis writes disjoint per-batch stat blocks -> PARALLEL
            # (uses both v7x TensorCores); the point-tile axis carries the
            # resident accumulators -> arbitrary.
            dimension_semantics=("parallel", "arbitrary"),
            vmem_limit_bytes=_pass_vmem_limit(tile_n, chain)),
        cost_estimate=pl.CostEstimate(flops=flops, transcendentals=0,
                                      bytes_accessed=bytes_accessed),
    )(*scales, *shifts, x, *weights)


# ----------------------------------------------------------------------------
# Forward pass
# ----------------------------------------------------------------------------
def _head(g, params):
    """mlp3: tiny (B rows) FC head kept in plain XLA (train-mode BN)."""

    def fc_bn_relu(h, w, b, gamma, beta):
        y = h @ w + b
        m = y.mean(0, keepdims=True)
        v = ((y - m) ** 2).mean(0, keepdims=True)
        return jnp.maximum((y - m) * lax.rsqrt(v + BN_EPS) * gamma + beta, 0.0)

    h = fc_bn_relu(g, params["fc_w"][0], params["fc_b"][0],
                   params["fc_gamma"][0], params["fc_beta"][0])
    # TODO(synk): Dropout(p=0.3) is stochastic in train mode; applied as
    # identity (eval semantics) for determinism.
    h = fc_bn_relu(h, params["fc_w"][1], params["fc_b"][1],
                   params["fc_gamma"][1], params["fc_beta"][1])
    return h @ params["fc_w"][2] + params["fc_b"][2]


def pointnet_forward(x, params, tile_n=None, pool_tile_n=None):
    """x: (B, number_points, 3) — PyTorch layout with transposed_input=False."""
    B, N, C = x.shape
    assert N % 8 == 0, "number_points must be divisible by 8"
    if tile_n is None:
        tile_n = _pick_tile(N, 4096)        # hidden passes (HBM-light)
    if pool_tile_n is None:
        pool_tile_n = _pick_tile(N, 2048)   # pool pass carries (tile, 1024) f32
    assert N % tile_n == 0 and tile_n % 8 == 0
    assert N % pool_tile_n == 0 and pool_tile_n % 8 == 0
    M = B * N
    bf16_minmax = _supports_bf16_vpu()

    # Layout glue: points-major, channels on the lane axis, xyz padded 3->8.
    xp = jnp.pad(x.astype(jnp.float32), ((0, 0), (0, 0), (0, PAD_CIN - C)))
    # TODO(synk): optionally store xp in bf16 to halve the (already small)
    # re-stream traffic; kept f32 for layout robustness of the 8-wide minor dim.

    # Weights pre-transposed to (Cin, Cout), bf16 for the MXU; layer 1 padded
    # 3->8 on the contraction dim (padded rows meet padded zero channels).
    weights = []
    for li, w in enumerate(params["conv_w"]):
        wb = w.astype(jnp.bfloat16)
        if li == 0:
            wb = jnp.pad(wb, ((0, PAD_CIN - C), (0, 0)))
        weights.append(wb)

    # Cascading stats/recompute passes (no intermediate activation hits HBM).
    scales, shifts = [], []
    mx = mn = None
    for li in range(len(weights)):
        pool = li == len(weights) - 1
        outs = _cascade_call(scales, shifts, xp, weights[:li + 1],
                             pool=pool,
                             tile_n=pool_tile_n if pool else tile_n,
                             bf16_minmax=bf16_minmax)
        # Two-level accumulation: per-batch partial sums combined in f32 here
        # (better conditioned, and what makes the batch axis PARALLEL-safe).
        s = jnp.sum(outs[0][:, 0, :], axis=0, keepdims=True)       # (1, cout)
        ss = jnp.sum(outs[1][:, 0, :], axis=0, keepdims=True)
        mean = s / M
        var = ss / M - mean * mean          # biased variance (train-mode BN)
        scale = params["conv_gamma"][li] * lax.rsqrt(var + BN_EPS)
        shift = params["conv_beta"][li] - mean * scale
        scales.append(scale)
        shifts.append(shift)
        if pool:
            mx, mn = outs[2][:, 0, :], outs[3][:, 0, :]             # (B, 1024)

    # Finish the fused max-pool: pooled post-BN feature is
    # relu(scale * (max if scale>=0 else min) + shift)  (monotone swap).
    pooled_raw = jnp.where(scales[-1] >= 0.0, mx, mn)
    g = jnp.maximum(pooled_raw * scales[-1] + shifts[-1], 0.0)      # (B, 1024)

    return _head(g, params)


# ----------------------------------------------------------------------------
# Parameters and pure-JAX reference
# ----------------------------------------------------------------------------
def init_params(key, num_classes=10):
    """PyTorch-style uniform fan-in init; weights pre-transposed to (in, out)."""

    def linear(k, n_in, n_out):
        k1, k2 = jax.random.split(k)
        bound = 1.0 / (n_in ** 0.5)
        w = jax.random.uniform(k1, (n_in, n_out), jnp.float32, -bound, bound)
        b = jax.random.uniform(k2, (1, n_out), jnp.float32, -bound, bound)
        return w, b

    fc_dims = [(1024, 512), (512, 256), (256, num_classes)]
    keys = jax.random.split(key, len(CONV_DIMS) + len(fc_dims))
    params = {"conv_w": [], "conv_b": [], "conv_gamma": [], "conv_beta": [],
              "fc_w": [], "fc_b": [], "fc_gamma": [], "fc_beta": []}
    for k, (ci, co) in zip(keys[:len(CONV_DIMS)], CONV_DIMS):
        w, b = linear(k, ci, co)
        params["conv_w"].append(w)
        params["conv_b"].append(b)      # used by the reference only; the kernel
        params["conv_gamma"].append(jnp.ones((1, co), jnp.float32))   # drops it
        params["conv_beta"].append(jnp.zeros((1, co), jnp.float32))   # (BN-cancelled)
    for i, (k, (ci, co)) in enumerate(zip(keys[len(CONV_DIMS):], fc_dims)):
        w, b = linear(k, ci, co)
        params["fc_w"].append(w)
        params["fc_b"].append(b)
        if i < 2:
            params["fc_gamma"].append(jnp.ones((1, co), jnp.float32))
            params["fc_beta"].append(jnp.zeros((1, co), jnp.float32))
    return params


def pointnet_reference(x, params):
    """Pure-JAX mirror of the PyTorch forward: train-mode BN (biased var,
    eps=1e-5), conv biases included, dropout as identity, global max-pool.
    Matmul operands are rounded to bf16 to mirror the kernel's MXU dtype."""

    def bf16(a):
        return a.astype(jnp.bfloat16).astype(jnp.float32)

    B, N, C = x.shape
    h = x.reshape(B * N, C).astype(jnp.float32)
    for w, b, gamma, beta in zip(params["conv_w"], params["conv_b"],
                                 params["conv_gamma"], params["conv_beta"]):
        y = bf16(h) @ bf16(w) + b
        m = y.mean(0, keepdims=True)
        v = ((y - m) ** 2).mean(0, keepdims=True)
        h = jnp.maximum((y - m) * lax.rsqrt(v + BN_EPS) * gamma + beta, 0.0)
    g = h.reshape(B, N, -1).max(axis=1)           # MaxPool1d(number_points)
    return _head(g, params)


if __name__ == "__main__":
    B, N = 8, 64                    # batch, number_points (divisible by 8)
    NUM_CLASSES = 10
    key = jax.random.PRNGKey(0)
    kx, kp = jax.random.split(key)
    x = jax.random.normal(kx, (B, N, 3), jnp.float32)   # (batch, points, xyz)
    params = init_params(kp, NUM_CLASSES)

    out = jax.block_until_ready(pointnet_forward(x, params))
    ref = jax.block_until_ready(pointnet_reference(x, params))

    assert out.shape == (B, NUM_CLASSES)
    # bf16 MXU operands / bf16 max-min tracking vs the f32-stat reference:
    # allow a few % tolerance.
    if not jnp.allclose(out, ref, rtol=3e-2, atol=3e-2):
        raise AssertionError("Pallas PointNet output mismatch vs JAX reference")
    print("KERNEL_OK")
</pallas_src>

<mosaic_0001>
module attributes {stable_mosaic.version = 11 : i64} {
  func.func @kernel(%arg0: i32, %arg1: i32, %arg2: memref<1x64x8xf32, #tpu.memory_space<vmem>>, %arg3: memref<8x64xbf16, #tpu.memory_space<vmem>>, %arg4: memref<1x1x64xf32, #tpu.memory_space<vmem>>, %arg5: memref<1x1x64xf32, #tpu.memory_space<vmem>>) attributes {dimension_semantics = [#tpu.dimension_semantics<parallel>, #tpu.dimension_semantics<arbitrary>], iteration_bounds = array<i64: 8, 1>, scalar_prefetch = 0 : i64, scratch_operands = 0 : i64, tpu.core_type = #tpu.core_type<tc>, window_params = [{transform_indices = @transform_0, window_bounds = array<i64: 1, 64, 8>}, {pipeline_mode = #tpu.pipeline_mode<synchronous>, transform_indices = @transform_1, window_bounds = array<i64: 8, 64>}, {transform_indices = @transform_2, window_bounds = array<i64: 1, 1, 64>}, {transform_indices = @transform_3, window_bounds = array<i64: 1, 1, 64>}]} {
    %c0_i32 = arith.constant 0 : i32
    %0 = arith.cmpi eq, %arg1, %c0_i32 : i32
    %1 = arith.extui %0 : i1 to i32
    %c0_i32_0 = arith.constant 0 : i32
    %2 = arith.cmpi ne, %1, %c0_i32_0 : i32
    scf.if %2 {
      %cst_22 = arith.constant 0.000000e+00 : f32
      %28 = vector.broadcast %cst_22 : f32 to vector<1x64xf32>
      %c0_23 = arith.constant 0 : index
      %c0_24 = arith.constant 0 : index
      %c0_25 = arith.constant 0 : index
      %29 = vector.load %arg4[%c0_23, %c0_24, %c0_25] : memref<1x1x64xf32, #tpu.memory_space<vmem>>, vector<1x1x64xf32>
      %30 = vector.shape_cast %29 : vector<1x1x64xf32> to vector<1x64xf32>
      %31 = vector.shape_cast %28 : vector<1x64xf32> to vector<1x1x64xf32>
      tpu.vector_store %arg4[%c0_23, %c0_24, %c0_25], %31 {strides = array<i32>} : memref<1x1x64xf32, #tpu.memory_space<vmem>>, vector<1x1x64xf32>,
      %cst_26 = arith.constant 0.000000e+00 : f32
      %32 = vector.broadcast %cst_26 : f32 to vector<1x64xf32>
      %c0_27 = arith.constant 0 : index
      %c0_28 = arith.constant 0 : index
      %c0_29 = arith.constant 0 : index
      %33 = vector.load %arg5[%c0_27, %c0_28, %c0_29] : memref<1x1x64xf32, #tpu.memory_space<vmem>>, vector<1x1x64xf32>
      %34 = vector.shape_cast %33 : vector<1x1x64xf32> to vector<1x64xf32>
      %35 = vector.shape_cast %32 : vector<1x64xf32> to vector<1x1x64xf32>
      tpu.vector_store %arg5[%c0_27, %c0_28, %c0_29], %35 {strides = array<i32>} : memref<1x1x64xf32, #tpu.memory_space<vmem>>, vector<1x1x64xf32>,
    } else {
    }
    %c0 = arith.constant 0 : index
    %c0_1 = arith.constant 0 : index
    %c0_2 = arith.constant 0 : index
    %3 = vector.load %arg2[%c0, %c0_1, %c0_2] : memref<1x64x8xf32, #tpu.memory_space<vmem>>, vector<1x64x8xf32>
    %4 = vector.shape_cast %3 : vector<1x64x8xf32> to vector<64x8xf32>
    %5 = arith.truncf %4 : vector<64x8xf32> to vector<64x8xbf16>
    %c0_3 = arith.constant 0 : index
    %c0_4 = arith.constant 0 : index
    %6 = vector.load %arg3[%c0_3, %c0_4] : memref<8x64xbf16, #tpu.memory_space<vmem>>, vector<8x64xbf16>
    %cst = arith.constant dense<0.000000e+00> : vector<64x64xf32>
    %7 = tpu.matmul %5, %6, %cst {dimension_numbers = #tpu.dot_dimension_numbers<[1], [0], [0], [1], [0, 0, 1, 1], [], []>} : vector<64x8xbf16>, vector<8x64xbf16>, vector<64x64xf32> -> vector<64x64xf32>
    %8 = arith.extf %5 : vector<64x8xbf16> to vector<64x8xf32>
    %cst_5 = arith.constant dense<0.000000e+00> : vector<8xf32>
    %9 = vector.multi_reduction <add>, %8, %cst_5 [0] : vector<64x8xf32> to vector<8xf32>
    %10 = vector.shape_cast %9 : vector<8xf32> to vector<1x8xf32>
    %c0_6 = arith.constant 0 : index
    %c0_7 = arith.constant 0 : index
    %c0_8 = arith.constant 0 : index
    %11 = vector.load %arg4[%c0_6, %c0_7, %c0_8] : memref<1x1x64xf32, #tpu.memory_space<vmem>>, vector<1x1x64xf32>
    %12 = vector.shape_cast %11 : vector<1x1x64xf32> to vector<1x64xf32>
    %c0_9 = arith.constant 0 : index
    %c0_10 = arith.constant 0 : index
    %13 = vector.load %arg3[%c0_9, %c0_10] : memref<8x64xbf16, #tpu.memory_space<vmem>>, vector<8x64xbf16>
    %cst_11 = arith.constant dense<0.000000e+00> : vector<1x64xf32>
    %14 = tpu.matmul %10, %13, %cst_11 {dimension_numbers = #tpu.dot_dimension_numbers<[1], [0], [0], [1], [0, 0, 1, 1], [], []>} : vector<1x8xf32>, vector<8x64xbf16>, vector<1x64xf32> -> vector<1x64xf32>
    %15 = arith.addf %12, %14 : vector<1x64xf32>
    %c0_12 = arith.constant 0 : index
    %c0_13 = arith.constant 0 : index
    %c0_14 = arith.constant 0 : index
    %16 = vector.load %arg4[%c0_12, %c0_13, %c0_14] : memref<1x1x64xf32, #tpu.memory_space<vmem>>, vector<1x1x64xf32>
    %17 = vector.shape_cast %16 : vector<1x1x64xf32> to vector<1x64xf32>
    %18 = vector.shape_cast %15 : vector<1x64xf32> to vector<1x1x64xf32>
    tpu.vector_store %arg4[%c0_12, %c0_13, %c0_14], %18 {strides = array<i32>} : memref<1x1x64xf32, #tpu.memory_space<vmem>>, vector<1x1x64xf32>,
    %c0_15 = arith.constant 0 : index
    %c0_16 = arith.constant 0 : index
    %c0_17 = arith.constant 0 : index
    %19 = vector.load %arg5[%c0_15, %c0_16, %c0_17] : memref<1x1x64xf32, #tpu.memory_space<vmem>>, vector<1x1x64xf32>
    %20 = vector.shape_cast %19 : vector<1x1x64xf32> to vector<1x64xf32>
    %21 = arith.mulf %7, %7 : vector<64x64xf32>
    %cst_18 = arith.constant dense<0.000000e+00> : vector<64xf32>
    %22 = vector.multi_reduction <add>, %21, %cst_18 [0] : vector<64x64xf32> to vector<64xf32>
    %23 = vector.shape_cast %22 : vector<64xf32> to vector<1x64xf32>
    %24 = arith.addf %20, %23 : vector<1x64xf32>
    %c0_19 = arith.constant 0 : index
    %c0_20 = arith.constant 0 : index
    %c0_21 = arith.constant 0 : index
    %25 = vector.load %arg5[%c0_19, %c0_20, %c0_21] : memref<1x1x64xf32, #tpu.memory_space<vmem>>, vector<1x1x64xf32>
    %26 = vector.shape_cast %25 : vector<1x1x64xf32> to vector<1x64xf32>
    %27 = vector.shape_cast %24 : vector<1x64xf32> to vector<1x1x64xf32>
    tpu.vector_store %arg5[%c0_19, %c0_20, %c0_21], %27 {strides = array<i32>} : memref<1x1x64xf32, #tpu.memory_space<vmem>>, vector<1x1x64xf32>,
    return
  }
  func.func @transform_0(%arg0: i32, %arg1: i32) -> (i32, i32, i32) {
    %c0_i32 = arith.constant 0 : i32
    %c0_i32_0 = arith.constant 0 : i32
    return %arg0, %arg1, %c0_i32 : i32, i32, i32
  }
  func.func @transform_1(%arg0: i32, %arg1: i32) -> (i32, i32) {
    %c0_i32 = arith.constant 0 : i32
    %c0_i32_0 = arith.constant 0 : i32
    %c0_i32_1 = arith.constant 0 : i32
    return %c0_i32, %c0_i32_0 : i32, i32
  }
  func.func @transform_2(%arg0: i32, %arg1: i32) -> (i32, i32, i32) {
    %c0_i32 = arith.constant 0 : i32
    %c0_i32_0 = arith.constant 0 : i32
    %c0_i32_1 = arith.constant 0 : i32
    return %arg0, %c0_i32, %c0_i32_0 : i32, i32, i32
  }
  func.func @transform_3(%arg0: i32, %arg1: i32) -> (i32, i32, i32) {
    %c0_i32 = arith.constant 0 : i32
    %c0_i32_0 = arith.constant 0 : i32
    %c0_i32_1 = arith.constant 0 : i32
    return %arg0, %c0_i32, %c0_i32_0 : i32, i32, i32
  }
}

</mosaic_0001>

<llo_original>
// kernel: tpu_custom_call.1
$region0: #{tpu_custom_call.1}
  #allocation0 [shape = 'u32[]', space=smem, size = 0x4, offset = 0x4, fixed_abs, tag = 'smem constant byte address 0x4 - core index']
  #allocation1 [shape = 'u32[144,128]{1,0:T(1,128)}', space=vmem, size = 0x12000, scoped, tag = 'internal scratch']
  %s0 = inlined_call_operand.vmem [shape: f32[8,64,8], index: 0, kind: input, shape index: {}]
  %s1 = inlined_call_operand.vmem [shape: bf16[8,64], index: 1, kind: input, shape index: {}]
  %s2 = inlined_call_operand.hbm [shape: f32[8,1,64], index: 2, kind: output, shape index: {0}]
  %s3 = inlined_call_operand.hbm [shape: f32[8,1,64], index: 3, kind: output, shape index: {1}]
  %4 = xla_tuple %s2, %s3
  %s5 = sld [smem:[#allocation0]]
  $region53: #{tpu_custom_call.1} parent=0
    _
  %s7 = ssub.s32 1, %s5
  %s8 = scalar_select 0, %s7, %s5
  $region1: #{tpu_custom_call.1} parent=0
    #allocation2 [shape = 'u8[1024]{0}', space=vmem, size = 0x400, scoped, tag = 'output window, operand 0']
    #allocation3 [shape = 's32[2]{0}', space=sflag, size = 0x8, scoped, tag = 'scoped memory for tpu_custom_call.1']
    #allocation4 [shape = 'u8[1024]{0}', space=vmem, size = 0x400, scoped, tag = 'output window, operand 1']
    #allocation5 [shape = 's32[2]{0}', space=sflag, size = 0x8, scoped, tag = 'scoped memory for tpu_custom_call.1']
    %9 = vsyncpa [#allocation3], 0
    %s10 = scalar_lea.sflag [#allocation3], 1
    %11 = vsyncpa %s10, 0
    %12 = vsyncpa [#allocation5], 0
    %s13 = scalar_lea.sflag [#allocation5], 1
    %14 = vsyncpa %s13, 0
    loop: start=0, step=1, limit=10
    $region2: #{tpu_custom_call.1} parent=1 // loop_pre_header
      _
    $region3: #{tpu_custom_call.1} parent=1 // loop_header
      %s16 = sphi 0, %s20
      %p17 = scmp.ge.s32.totalorder %s16, 10
      %s23 = sphi 0, %s35
      %s24 = sphi 0, %s31
      %s25 = sphi 0, %s23
      %s26 = sphi 0, %s24
      %s27 = sphi 0, %s25
      %s28 = sphi 0, %s26
      %s40 = sphi 0, %s42
      %s43 = sphi 0, %s40
      %s44 = sphi 0, %s43
      %s60 = sphi 0, %s44
      %s64 = sphi 0, %s64
      %s66 = sphi 0, %s64
      %s67 = sphi 0, %s66
      %s81 = sphi 0, %s67
      %s87 = sphi 0, %s89
      %s90 = sphi 0, %s87
      %s91 = sphi 0, %s90
      %s107 = sphi 0, %s91
      %s113 = sphi 0, %s115
      %s116 = sphi 0, %s113
      %s117 = sphi 0, %s116
      %s133 = sphi 0, %s117
    $region4: #{tpu_custom_call.1} parent=1 // loop_header_branch
      %19 = sbr.rel (%p17) target = $region8
    $region5: #{tpu_custom_call.1} parent=1 // loop_body
      %s21 = ssub.s32 %s16, 1
      %s22 = ssub.s32 %s16, 2
      %s29 = sadd.s32 1, %s24
      %p30 = scmp.ge.s32.totalorder %s29, 1
      %s31 = scalar_select %p30, 0, %s29
      %s32 = sadd.s32 1, %s23
      %s33 = scalar_select %p30, %s32, %s23
      %p34 = scmp.ge.s32.totalorder %s33, 8
      %s35 = scalar_select %p34, 0, %s33
      %s36 = ssub.s32 %s23, %s35
      %s37 = ssub.s32 %s24, %s31
      %s38 = sor.u32 %s36, %s37
      %p39 = scmp.eq.s32.totalorder %s38, 0
      %s41 = sadd.s32 %s40, 1
      %s42 = scalar_select %p39, %s40, %s41
      %p45 = pneg %p39
      %p46 = scmp.eq.s32.totalorder %s16, 7
      %p47 = por %p45, %p46
      %p48 = scmp.ne.s32.totalorder %s40, %s43
      %p49 = scmp.eq.s32.totalorder %s16, 0
      %p50 = por %p48, %p49
      %p51 = scmp.ne.s32.totalorder %s40, %s43
      %p52 = scmp.eq.s32.totalorder %s21, 7
      %p53 = por %p51, %p52
      %p54 = scmp.ne.s32.totalorder %s43, %s44
      %p55 = scmp.eq.s32.totalorder %s21, 0
      %p56 = por %p54, %p55
      %p57 = scmp.ne.s32.totalorder %s43, %s44
      %p58 = scmp.eq.s32.totalorder %s22, 7
      %p59 = por %p57, %p58
      %p61 = scmp.ne.s32.totalorder %s44, %s60
      %p62 = scmp.eq.s32.totalorder %s22, 0
      %p63 = por %p61, %p62
      %s65 = sadd.s32 %s64, 1
      %p68 = scmp.eq.s32.totalorder %s16, 7
      %p69 = scmp.ne.s32.totalorder %s64, %s66
      %p70 = scmp.eq.s32.totalorder %s16, 0
      %p71 = por %p69, %p70
      %p72 = scmp.ne.s32.totalorder %s64, %s66
      %p73 = scmp.eq.s32.totalorder %s21, 7
      %p74 = por %p72, %p73
      %p75 = scmp.ne.s32.totalorder %s66, %s67
      %p76 = scmp.eq.s32.totalorder %s21, 0
      %p77 = por %p75, %p76
      %p78 = scmp.ne.s32.totalorder %s66, %s67
      %p79 = scmp.eq.s32.totalorder %s22, 7
      %p80 = por %p78, %p79
      %p82 = scmp.ne.s32.totalorder %s67, %s81
      %p83 = scmp.eq.s32.totalorder %s22, 0
      %p84 = por %p82, %p83
      %s85 = ssub.s32 %s23, %s35
      %p86 = scmp.eq.s32.totalorder %s85, 0
      %s88 = sadd.s32 %s87, 1
      %s89 = scalar_select %p86, %s87, %s88
      %p92 = pneg %p86
      %p93 = scmp.eq.s32.totalorder %s16, 7
      %p94 = por %p92, %p93
      %p95 = scmp.ne.s32.totalorder %s87, %s90
      %p96 = scmp.eq.s32.totalorder %s16, 0
      %p97 = por %p95, %p96
      %p98 = scmp.ne.s32.totalorder %s87, %s90
      %p99 = scmp.eq.s32.totalorder %s21, 7
      %p100 = por %p98, %p99
      %p101 = scmp.ne.s32.totalorder %s90, %s91
      %p102 = scmp.eq.s32.totalorder %s21, 0
      %p103 = por %p101, %p102
      %p104 = scmp.ne.s32.totalorder %s90, %s91
      %p105 = scmp.eq.s32.totalorder %s22, 7
      %p106 = por %p104, %p105
      %p108 = scmp.ne.s32.totalorder %s91, %s107
      %p109 = scmp.eq.s32.totalorder %s22, 0
      %p110 = por %p108, %p109
      %s111 = ssub.s32 %s23, %s35
      %p112 = scmp.eq.s32.totalorder %s111, 0
      %s114 = sadd.s32 %s113, 1
      %s115 = scalar_select %p112, %s113, %s114
      %p118 = pneg %p112
      %p119 = scmp.eq.s32.totalorder %s16, 7
      %p120 = por %p118, %p119
      %p121 = scmp.ne.s32.totalorder %s113, %s116
      %p122 = scmp.eq.s32.totalorder %s16, 0
      %p123 = por %p121, %p122
      %p124 = scmp.ne.s32.totalorder %s113, %s116
      %p125 = scmp.eq.s32.totalorder %s21, 7
      %p126 = por %p124, %p125
      %p127 = scmp.ne.s32.totalorder %s116, %s117
      %p128 = scmp.eq.s32.totalorder %s21, 0
      %p129 = por %p127, %p128
      %p130 = scmp.ne.s32.totalorder %s116, %s117
      %p131 = scmp.eq.s32.totalorder %s22, 7
      %p132 = por %p130, %p131
      %p134 = scmp.ne.s32.totalorder %s117, %s133
      %p135 = scmp.eq.s32.totalorder %s22, 0
      %p136 = por %p134, %p135
      %p137 = scmp.le.s32.totalorder 1, %s16
      %p138 = scmp.lt.s32.totalorder %s16, 9
      %p139 = pnand %p137, %p138
      %p140 = pneg %p139
      // Predicated region
      $region9: #{tpu_custom_call.1} parent=5 // pred_check
        _
      $region10: #{tpu_custom_call.1} parent=5 // pred_check_branch
        %142 = sbr.rel (%p139) target = $region12
      $region11: #{tpu_custom_call.1} parent=5 // pred_region
        %s143 = ssub.s32 %s16, 1
        // Predicated region
        $region13: #{tpu_custom_call.1} parent=11 // pred_check
          %p144 = pneg %p77
        $region14: #{tpu_custom_call.1} parent=11 // pred_check_branch
          %146 = sbr.rel (%p144) target = $region16
        $region15: #{tpu_custom_call.1} parent=11 // pred_region
          _
        $region16: #{tpu_custom_call.1} parent=11 // pred_fallthru
          _
      $region12: #{tpu_custom_call.1} parent=5 // pred_fallthru
        _
      %p147 = scmp.lt.s32.totalorder %s16, 8
      // Predicated region
      $region17: #{tpu_custom_call.1} parent=5 // pred_check
        %p148 = pneg %p147
      $region18: #{tpu_custom_call.1} parent=5 // pred_check_branch
        %150 = sbr.rel (%p148) target = $region20
      $region19: #{tpu_custom_call.1} parent=5 // pred_region
        // Predicated region
        $region21: #{tpu_custom_call.1} parent=19 // pred_check
          %p151 = pneg %p50
        $region22: #{tpu_custom_call.1} parent=19 // pred_check_branch
          %153 = sbr.rel (%p151) target = $region24
        $region23: #{tpu_custom_call.1} parent=19 // pred_region
          %s154 = smul.u32 8, %s24
          %p155 = scmp.lt.s32.totalorder %s23, 7
          %s156 = scalar_select %p155, %s23, 7
          %p157 = scmp.lt.s32.totalorder %s154, 7
          %s158 = scalar_select %p157, %s154, 7
          %s159 = smul.addr %s156, 8
          %s160 = sadd.s32 %s158, %s159
          %s161 = smul.addr %s160, 8
          %s162 = scalar_lea.vmem %s0, %s161
          %s163 = smul.u32 8, %s24
        $region24: #{tpu_custom_call.1} parent=19 // pred_fallthru
          _
      $region20: #{tpu_custom_call.1} parent=5 // pred_fallthru
        _
      %p164 = scmp.le.s32.totalorder 1, %s16
      %p165 = scmp.lt.s32.totalorder %s16, 9
      %p166 = pnand %p164, %p165
      %p167 = pneg %p166
      // Predicated region
      $region25: #{tpu_custom_call.1} parent=5 // pred_check
        _
      $region26: #{tpu_custom_call.1} parent=5 // pred_check_branch
        %169 = sbr.rel (%p166) target = $region28
      $region27: #{tpu_custom_call.1} parent=5 // pred_region
        %s170 = ssub.s32 %s16, 1
        %s171 = smul.u32 8, %s26
        %p172 = scmp.lt.s32.totalorder %s25, 7
        %s173 = scalar_select %p172, %s25, 7
        %p174 = scmp.lt.s32.totalorder %s171, 7
        %s175 = scalar_select %p174, %s171, 7
        %s176 = smul.addr %s173, 8
        %s177 = sadd.s32 %s175, %s176
        %s178 = smul.addr %s177, 8
        %s179 = scalar_lea.vmem %s0, %s178
        %p180 = pneg %p56
        %p181 = pneg %p53
        %p182 = pneg %p77
        %p183 = pneg %p74
        %p184 = pneg %p103
        %p185 = pneg %p100
        %s186 = sand.u32 %s90, 1
        %s187 = scalar_lea.sflag [#allocation3], %s186
        %s188 = sand.u32 %s90, 1
        %s189 = scalar_lea.vmem [#allocation2], %s188
        %p190 = pneg %p129
        %p191 = pneg %p126
        %s192 = sand.u32 %s116, 1
        %s193 = scalar_lea.sflag [#allocation5], %s192
        %s194 = sand.u32 %s116, 1
        %s195 = scalar_lea.vmem [#allocation4], %s194
        %s196 = smul.u32 8, %s26
        %p197 = scmp.lt.s32.totalorder %s25, 7
        %s198 = scalar_select %p197, %s25, 7
        %p199 = scmp.lt.s32.totalorder %s196, 7
        %s200 = scalar_select %p199, %s196, 7
        %s201 = smul.addr %s198, 8
        %s202 = sadd.s32 %s200, %s201
        %s203 = smul.addr %s202, 8
        %s204 = scalar_lea.vmem %s0, %s203
        %s205 = smul.u32 8, %s26
        %p207 = scmp.eq.s32.totalorder %s26, 0
        // Predicated region
        $region29: #{tpu_custom_call.1} parent=27 // pred_check
          %p208 = pneg %p207
        $region30: #{tpu_custom_call.1} parent=27 // pred_check_branch
          %210 = sbr.rel (%p208) target = $region32
        $region31: #{tpu_custom_call.1} parent=27 // pred_region
          %vm211 = vcmask 516096
          %212 = vst.msk [vmem:[%s189] sm:$0x1] %vm211, 0.0
          %213 = vst.msk [vmem:[%s195] sm:$0x1] %vm211, 0.0
        $region32: #{tpu_custom_call.1} parent=27 // pred_fallthru
          _
        %v214 = vld [vmem:[%s204] sm:$0xff]
        %v215 = vld [vmem:[%s204 + $0x8] sm:$0xff]
        %v216 = vld [vmem:[%s204 + $0x10] sm:$0xff]
        %v217 = vld [vmem:[%s204 + $0x18] sm:$0xff]
        %v218 = vld [vmem:[%s204 + $0x20] sm:$0xff]
        %v219 = vld [vmem:[%s204 + $0x28] sm:$0xff]
        %v220 = vld [vmem:[%s204 + $0x30] sm:$0xff]
        %v221 = vld [vmem:[%s204 + $0x38] sm:$0xff]
        %v222 = vpack.c.bf16 %v215, %v214
        %v223 = vpack.c.bf16 %v217, %v216
        %v224 = vpack.c.bf16 %v219, %v218
        %v225 = vpack.c.bf16 %v221, %v220
        %v226 = vld [vmem:[%s1] sm:$0xf]
        %vm227 = vcmask 64512
        %v229 = vsel %vm227, %v222, 0
        %v232 = vsel %vm227, %v223, 0
        %v235 = vsel %vm227, %v224, 0
        %v238 = vsel %vm227, %v225, 0
        %vm240 = vcmask 1043456
        %v242 = vsel %vm240, %v226, 0
        %244 = vmatprep.subr.bf16.mxu0 0
        %245 = vmatpush1.bf16.msra.mxu0 %v242
        %246 = vmatprep.subr.bf16.mxu0 0
        %247 = vmatpush1.bf16.msra.mxu0 0
        %248 = vmatprep.subr.bf16.mxu0 0
        %249 = vmatpush1.bf16.msra.mxu0 0
        %250 = vmatprep.subr.bf16.mxu0 0
        %251 = vmatpush1.bf16.msra.mxu0 0
        %252 = vmatprep.subr.bf16.mxu0 0
        %253 = vmatpush1.bf16.msra.mxu0 0
        %254 = vmatprep.subr.bf16.mxu0 0
        %255 = vmatpush1.bf16.msra.mxu0 0
        %256 = vmatprep.subr.bf16.mxu0 0
        %257 = vmatpush1.bf16.msra.mxu0 0
        %258 = vmatprep.subr.bf16.mxu0 0
        %259 = vmatpush1.bf16.msra.mxu0 0
        %260 = vmatprep.subr.bf16.mxu0 0
        %261 = vmatpush1.bf16.msra.mxu0 0
        %262 = vmatprep.subr.bf16.mxu0 0
        %263 = vmatpush1.bf16.msra.mxu0 0
        %264 = vmatprep.subr.bf16.mxu0 0
        %265 = vmatpush1.bf16.msra.mxu0 0
        %266 = vmatprep.subr.bf16.mxu0 0
        %267 = vmatpush1.bf16.msra.mxu0 0
        %268 = vmatprep.subr.bf16.mxu0 0
        %269 = vmatpush1.bf16.msra.mxu0 0
        %270 = vmatprep.subr.bf16.mxu0 0
        %271 = vmatpush1.bf16.msra.mxu0 0
        %272 = vmatprep.subr.bf16.mxu0 0
        %273 = vmatpush1.bf16.msra.mxu0 0
        %274 = vmatprep.subr.bf16.mxu0 0
        %275 = vmatpush1.bf16.msra.mxu0 0
        %276 = vmatprep.mubr.bf16.mxu0 0
        %277 = vmatmul.mubr.bf16.gmra.mrb[0].mxu0 %v229
        %v278 = vpop.f32.mrb[0].mxu0
        %v279 = vadd.f32 0.0, %v278
        %v280 = vpop.f32.mrb[0].mxu0
        %v281 = vpop.f32.mrb[0].mxu0
        %v282 = vadd.f32 0.0, %v281
        %v283 = vpop.f32.mrb[0].mxu0
        %284 = vmatprep.mubr.bf16.mxu0 0
        %285 = vmatmul.mubr.bf16.gmra.mrb[0].mxu0 %v232
        %v286 = vpop.f32.mrb[0].mxu0
        %v287 = vadd.f32 0.0, %v286
        %v288 = vpop.f32.mrb[0].mxu0
        %v289 = vpop.f32.mrb[0].mxu0
        %v290 = vadd.f32 0.0, %v289
        %v291 = vpop.f32.mrb[0].mxu0
        %292 = vmatprep.mubr.bf16.mxu0 0
        %293 = vmatmul.mubr.bf16.gmra.mrb[0].mxu0 %v235
        %v294 = vpop.f32.mrb[0].mxu0
        %v295 = vadd.f32 0.0, %v294
        %v296 = vpop.f32.mrb[0].mxu0
        %v297 = vpop.f32.mrb[0].mxu0
        %v298 = vadd.f32 0.0, %v297
        %v299 = vpop.f32.mrb[0].mxu0
        %300 = vmatprep.mubr.bf16.mxu0 0
        %301 = vmatmul.mubr.bf16.gmra.mrb[0].mxu0 %v238
        %v302 = vpop.f32.mrb[0].mxu0
        %v303 = vadd.f32 0.0, %v302
        %v304 = vpop.f32.mrb[0].mxu0
        %v305 = vpop.f32.mrb[0].mxu0
        %v306 = vadd.f32 0.0, %v305
        %v307 = vpop.f32.mrb[0].mxu0
        %308 = vdwg.mxu0
        %v309 = vunpack.c.l.bf16 %v222
        %v310 = vunpack.c.h.bf16 %v222
        %v311 = vunpack.c.l.bf16 %v223
        %v312 = vunpack.c.h.bf16 %v223
        %v313 = vunpack.c.l.bf16 %v224
        %v314 = vunpack.c.h.bf16 %v224
        %v315 = vunpack.c.l.bf16 %v225
        %v316 = vunpack.c.h.bf16 %v225
        %v317 = vsel %vm227, %v309, 0.0
        %v318 = vsel %vm227, %v310, 0.0
        %v319 = vadd.f32 %v317, %v318
        %v320 = vsel %vm227, %v311, 0.0
        %v321 = vadd.f32 %v319, %v320
        %v322 = vsel %vm227, %v312, 0.0
        %v323 = vadd.f32 %v321, %v322
        %v324 = vsel %vm227, %v313, 0.0
        %v325 = vadd.f32 %v323, %v324
        %v326 = vsel %vm227, %v314, 0.0
        %v327 = vadd.f32 %v325, %v326
        %v328 = vsel %vm227, %v315, 0.0
        %v329 = vadd.f32 %v327, %v328
        %v330 = vsel %vm227, %v316, 0.0
        %v331 = vadd.f32 %v329, %v330
        %v332 = vrot.slane %v331, 4
        %v333 = vadd.f32 %v331, %v332
        %v334 = vrot.slane %v333, 2
        %v335 = vadd.f32 %v333, %v334
        %v336 = vrot.slane %v335, 1
        %v337 = vadd.f32 %v335, %v336
        %v338 = vld [vmem:[%s189] sm:$0x1]
        %v340 = vsel %vm227, %v337, 0
        %342 = vmatprep.subr.bf16.mxu0 0
        %343 = vmatpush1.bf16.msra.mxu0 %v242
        %344 = vmatprep.subr.bf16.mxu0 0
        %345 = vmatpush1.bf16.msra.mxu0 0
        %346 = vmatprep.subr.bf16.mxu0 0
        %347 = vmatpush1.bf16.msra.mxu0 0
        %348 = vmatprep.subr.bf16.mxu0 0
        %349 = vmatpush1.bf16.msra.mxu0 0
        %350 = vmatprep.subr.bf16.mxu0 0
        %351 = vmatpush1.bf16.msra.mxu0 0
        %352 = vmatprep.subr.bf16.mxu0 0
        %353 = vmatpush1.bf16.msra.mxu0 0
        %354 = vmatprep.subr.bf16.mxu0 0
        %355 = vmatpush1.bf16.msra.mxu0 0
        %356 = vmatprep.subr.bf16.mxu0 0
        %357 = vmatpush1.bf16.msra.mxu0 0
        %358 = vmatprep.subr.bf16.mxu0 0
        %359 = vmatpush1.bf16.msra.mxu0 0
        %360 = vmatprep.subr.bf16.mxu0 0
        %361 = vmatpush1.bf16.msra.mxu0 0
        %362 = vmatprep.subr.bf16.mxu0 0
        %363 = vmatpush1.bf16.msra.mxu0 0
        %364 = vmatprep.subr.bf16.mxu0 0
        %365 = vmatpush1.bf16.msra.mxu0 0
        %366 = vmatprep.subr.bf16.mxu0 0
        %367 = vmatpush1.bf16.msra.mxu0 0
        %368 = vmatprep.subr.bf16.mxu0 0
        %369 = vmatpush1.bf16.msra.mxu0 0
        %370 = vmatprep.subr.bf16.mxu0 0
        %371 = vmatpush1.bf16.msra.mxu0 0
        %372 = vmatprep.subr.bf16.mxu0 0
        %373 = vmatpush1.bf16.msra.mxu0 0
        %374 = vmatprep.mubr.f32.mxu0 0.0
        %375 = vmatmul.mubr.f32.gmra.mrb[0].mxu0 %v340
        %v376 = vpop.f32.mrb[0].mxu0
        %v377 = vadd.f32 0.0, %v376
        %v378 = vpop.f32.mrb[0].mxu0
        %379 = vdwg.mxu0
        %v380 = vadd.f32 %v338, %v377
        %vm381 = vcmask 516096
        %382 = vst.msk [vmem:[%s189] sm:$0x1] %vm381, %v380
        %v383 = vld [vmem:[%s195] sm:$0x1]
        %v384 = vmul.f32 %v279, %v279
        %v385 = vmul.f32 %v282, %v282
        %v386 = vmul.f32 %v287, %v287
        %v387 = vmul.f32 %v290, %v290
        %v388 = vmul.f32 %v295, %v295
        %v389 = vmul.f32 %v298, %v298
        %v390 = vmul.f32 %v303, %v303
        %v391 = vmul.f32 %v306, %v306
        %vm392 = vcmask 523264
        %v393 = vsel %vm392, %v384, 0.0
        %v394 = vsel %vm392, %v385, 0.0
        %v395 = vadd.f32 %v393, %v394
        %v396 = vsel %vm392, %v386, 0.0
        %v397 = vadd.f32 %v395, %v396
        %v398 = vsel %vm392, %v387, 0.0
        %v399 = vadd.f32 %v397, %v398
        %v400 = vsel %vm392, %v388, 0.0
        %v401 = vadd.f32 %v399, %v400
        %v402 = vsel %vm392, %v389, 0.0
        %v403 = vadd.f32 %v401, %v402
        %v404 = vsel %vm392, %v390, 0.0
        %v405 = vadd.f32 %v403, %v404
        %v406 = vsel %vm392, %v391, 0.0
        %v407 = vadd.f32 %v405, %v406
        %v408 = vrot.slane %v407, 4
        %v409 = vadd.f32 %v407, %v408
        %v410 = vrot.slane %v409, 2
        %v411 = vadd.f32 %v409, %v410
        %v412 = vrot.slane %v411, 1
        %v413 = vadd.f32 %v411, %v412
        %v414 = vadd.f32 %v383, %v413
        %415 = vst.msk [vmem:[%s195] sm:$0x1] %vm381, %v414
        %s416 = sand.u32 %s90, 1
        %s417 = scalar_lea.sflag [#allocation3], %s416
        %s418 = sand.u32 %s90, 1
        %s419 = scalar_lea.vmem [#allocation2], %s418
        %s420 = sand.u32 %s116, 1
        %s421 = scalar_lea.sflag [#allocation5], %s420
        %s422 = sand.u32 %s116, 1
        %s423 = scalar_lea.vmem [#allocation4], %s422
        // Predicated region
        $region33: #{tpu_custom_call.1} parent=27 // pred_check
          %p424 = pneg %p100
        $region34: #{tpu_custom_call.1} parent=27 // pred_check_branch
          %426 = sbr.rel (%p424) target = $region36
        $region35: #{tpu_custom_call.1} parent=27 // pred_region
          %s428 = ssub.s32 16, 16
          %429 = vsyncadd %s417, %s428
          %s430 = smul.addr %s25, 16
          %s431 = scalar_lea.hbm %s2, %s430
          %s433 = sshll.u32 %s419, 4
          %s434 = int_to_ptr.vmem [resolvable:$true] %s433
          %436 = dma.vmem_to_hbm [thread:$0]  %s434, 16, %s431, %s417
        $region36: #{tpu_custom_call.1} parent=27 // pred_fallthru
          _
        // Predicated region
        $region37: #{tpu_custom_call.1} parent=27 // pred_check
          %p437 = pneg %p126
        $region38: #{tpu_custom_call.1} parent=27 // pred_check_branch
          %439 = sbr.rel (%p437) target = $region40
        $region39: #{tpu_custom_call.1} parent=27 // pred_region
          %s441 = ssub.s32 16, 16
          %442 = vsyncadd %s421, %s441
          %s443 = smul.addr %s25, 16
          %s444 = scalar_lea.hbm %s3, %s443
          %s446 = sshll.u32 %s423, 4
          %s447 = int_to_ptr.vmem [resolvable:$true] %s446
          %449 = dma.vmem_to_hbm [thread:$0]  %s447, 16, %s444, %s421
        $region40: #{tpu_custom_call.1} parent=27 // pred_fallthru
          _
      $region28: #{tpu_custom_call.1} parent=5 // pred_fallthru
        _
      %p450 = scmp.le.s32.totalorder 2, %s16
      // Predicated region
      $region41: #{tpu_custom_call.1} parent=5 // pred_check
        %p451 = pneg %p450
      $region42: #{tpu_custom_call.1} parent=5 // pred_check_branch
        %453 = sbr.rel (%p451) target = $region44
      $region43: #{tpu_custom_call.1} parent=5 // pred_region
        %s454 = ssub.s32 %s16, 2
        // Predicated region
        $region45: #{tpu_custom_call.1} parent=43 // pred_check
          %p455 = pneg %p106
        $region46: #{tpu_custom_call.1} parent=43 // pred_check_branch
          %457 = sbr.rel (%p455) target = $region48
        $region47: #{tpu_custom_call.1} parent=43 // pred_region
          %s458 = sand.u32 %s91, 1
          %s459 = scalar_lea.sflag [#allocation3], %s458
          %s460 = sand.u32 %s91, 1
          %s461 = scalar_lea.vmem [#allocation2], %s460
          %462 = dma.done %s459, 16
        $region48: #{tpu_custom_call.1} parent=43 // pred_fallthru
          _
        // Predicated region
        $region49: #{tpu_custom_call.1} parent=43 // pred_check
          %p463 = pneg %p132
        $region50: #{tpu_custom_call.1} parent=43 // pred_check_branch
          %465 = sbr.rel (%p463) target = $region52
        $region51: #{tpu_custom_call.1} parent=43 // pred_region
          %s466 = sand.u32 %s117, 1
          %s467 = scalar_lea.sflag [#allocation5], %s466
          %s468 = sand.u32 %s117, 1
          %s469 = scalar_lea.vmem [#allocation4], %s468
          %470 = dma.done %s467, 16
        $region52: #{tpu_custom_call.1} parent=43 // pred_fallthru
          _
      $region44: #{tpu_custom_call.1} parent=5 // pred_fallthru
        _
    $region6: #{tpu_custom_call.1} parent=1 // loop_footer
      %s20 = sadd.s32 1, %s16
    $region7: #{tpu_custom_call.1} parent=1 // loop_footer_branch
      %15 = sbr.rel target = $region3
    $region8: #{tpu_custom_call.1} parent=1 // loop_exit
      _
    %471 = vsyncpa [#allocation3], 1
    %s472 = scalar_lea.sflag [#allocation3], 1
    %473 = vsyncpa %s472, 1
    %474 = vsyncpa [#allocation5], 1
    %s475 = scalar_lea.sflag [#allocation5], 1
    %476 = vsyncpa %s475, 1

</llo_original>
